<compile_context>
chip_gen: v7x
topology: tpu7x:2x2x1
jax: 0.10.0
libtpu: 0.0.40
codegen_flags: <defaults>
</compile_context>

<pallas_src>
import functools

import jax
import jax.numpy as jnp
from jax.experimental import pallas as pl
from jax.experimental.pallas import tpu as pltpu

IN_FEATURES = 4
HIDDEN = 128


def _round_up(x, m):
    return ((x + m - 1) // m) * m


def dqn_kernel(x_ref, pw_ref, w2_ref, w3_ref, o_ref, *, num_actions):
    # pw_ref packs, in one (8,128) f32 tile:
    #   rows 0..3 : w1t  (4 x 128)
    #   row  4    : b1   (128,)
    #   row  5    : b2   (128,)
    #   row  6    : b3 zero-padded to 128 lanes
    #   row  7    : unused (zeros)
    pw = pw_ref[...]                                     # single vreg tile
    w1 = pw[0:IN_FEATURES, :]                            # (4, 128)
    b1 = pw[IN_FEATURES:IN_FEATURES + 1, :]              # (1, 128)
    b2 = pw[IN_FEATURES + 1:IN_FEATURES + 2, :]          # (1, 128)
    b3 = pw[IN_FEATURES + 2:IN_FEATURES + 3, 0:num_actions]  # (1, NA)

    x = x_ref[...]                                       # (TB, 4) f32

    # Layer 1: K=4 contraction is ~1-3% MXU utilization -> do it on the VPU as
    # 4 broadcast multiply-adds instead (static unroll, all f32).
    h1 = x[:, 0:1] * w1[0:1, :] + b1                     # (TB, 128)
    for k in range(1, IN_FEATURES):
        h1 = h1 + x[:, k:k + 1] * w1[k:k + 1, :]
    h1 = jnp.maximum(h1, 0.0)

    # Layers 2/3: bf16 operands into the MXU, f32 accumulation.
    h2 = jnp.dot(h1.astype(jnp.bfloat16), w2_ref[...],
                 preferred_element_type=jnp.float32)
    h2 = jnp.maximum(h2 + b2, 0.0)
    out = jnp.dot(h2.astype(jnp.bfloat16), w3_ref[...],
                  preferred_element_type=jnp.float32)    # (TB, 128), padded cols are 0

    # Narrow store: only num_actions lanes go back to HBM.
    o_ref[...] = (out[:, 0:num_actions] + b3).astype(o_ref.dtype)


def pack_params(params):
    """One-time repack of PyTorch-style params for the kernel.

    Folds w1t + all biases into a single (8,128) f32 tile (one DMA instead of five),
    pads the last layer to 128 output lanes (zeros -> exact after slicing), and casts
    the two big weight matrices to bf16 for the MXU.
    """
    w1t, b1, w2t, b2, w3t, b3 = params
    num_actions = w3t.shape[1]
    assert w1t.shape == (IN_FEATURES, HIDDEN)
    assert w2t.shape == (HIDDEN, HIDDEN)
    assert num_actions <= HIDDEN, "num_actions must be <= 128 for the packed layout"

    pw = jnp.zeros((8, HIDDEN), jnp.float32)
    pw = pw.at[0:IN_FEATURES, :].set(w1t.astype(jnp.float32))
    pw = pw.at[IN_FEATURES, :].set(b1.reshape(-1).astype(jnp.float32))
    pw = pw.at[IN_FEATURES + 1, :].set(b2.reshape(-1).astype(jnp.float32))
    pw = pw.at[IN_FEATURES + 2, :num_actions].set(b3.reshape(-1).astype(jnp.float32))

    w2t_bf16 = w2t.astype(jnp.bfloat16)
    w3t_pad = jnp.zeros((HIDDEN, HIDDEN), jnp.bfloat16)
    w3t_pad = w3t_pad.at[:, :num_actions].set(w3t.astype(jnp.bfloat16))
    return pw, w2t_bf16, w3t_pad, num_actions


def dqn_forward(x, packed, *, block_b=1024):
    """Fused DQN forward. x: (B, 4) f32. Returns (B, num_actions) f32."""
    pw, w2t, w3t_pad, num_actions = packed
    assert x.ndim == 2 and x.shape[1] == IN_FEATURES, "expected flattened (B, 4) input"
    B = x.shape[0]

    # Batch tile: multiple of 8 (f32 sublane). Default 1024 amortizes the fixed
    # per-grid-step overhead; cap at ceil(B/2) (when B > 8) so the grid has >= 2
    # steps and both v7x TensorCores are used. VMEM stays tiny at these tiles
    # (x block lane-padded to 128 lanes: tb*128*4 B; ~0.5 MB per buffer at tb=1024)
    # on all of v5e / v6e / v7x.
    tb_cap = _round_up(max(B, 1), 8)
    if B > 8:
        tb_cap = min(tb_cap, _round_up(-(-B // 2), 8))
    tb = max(8, min(_round_up(block_b, 8), tb_cap))
    b_pad = _round_up(B, tb)
    if b_pad != B:
        x = jnp.pad(x, ((0, b_pad - B), (0, 0)))
    grid = (b_pad // tb,)

    flops = 2 * b_pad * (IN_FEATURES * HIDDEN + HIDDEN * HIDDEN + HIDDEN * HIDDEN)
    bytes_accessed = (
        4 * b_pad * IN_FEATURES              # x in (f32)
        + 4 * b_pad * num_actions            # narrow output (f32)
        + 4 * pw.size                        # packed w1/bias tile (f32, resident)
        + 2 * (w2t.size + w3t_pad.size)      # bf16 weights (resident)
    )

    kernel = functools.partial(dqn_kernel, num_actions=num_actions)

    out = pl.pallas_call(
        kernel,
        out_shape=jax.ShapeDtypeStruct((b_pad, num_actions), jnp.float32),
        grid=grid,
        in_specs=[
            # x streams per batch tile
            pl.BlockSpec((tb, IN_FEATURES), lambda i: (i, 0)),
            # weights: constant index_map -> one DMA, resident in VMEM for all tiles
            pl.BlockSpec(pw.shape, lambda i: (0, 0)),
            pl.BlockSpec(w2t.shape, lambda i: (0, 0)),
            pl.BlockSpec(w3t_pad.shape, lambda i: (0, 0)),
        ],
        # Narrow, full-last-dim output block (legal: last dim equals array dim).
        out_specs=pl.BlockSpec((tb, num_actions), lambda i: (i, 0)),
        compiler_params=pltpu.CompilerParams(
            dimension_semantics=("parallel",),  # shard batch tiles across v7x's 2 TCs
        ),
        cost_estimate=pl.CostEstimate(
            flops=flops, transcendentals=0, bytes_accessed=bytes_accessed),
    )(x, pw, w2t, w3t_pad)

    return out if b_pad == B else out[:B]


def init_params(key, num_actions):
    """Deterministic init mimicking PyTorch nn.Linear default (U(-1/sqrt(fan_in), +))."""
    def linear(k, fan_in, fan_out):
        kw, kb = jax.random.split(k)
        bound = 1.0 / jnp.sqrt(fan_in)
        w_t = jax.random.uniform(kw, (fan_in, fan_out), jnp.float32, -bound, bound)
        b = jax.random.uniform(kb, (1, fan_out), jnp.float32, -bound, bound)
        return w_t, b

    k1, k2, k3 = jax.random.split(key, 3)
    w1t, b1 = linear(k1, IN_FEATURES, HIDDEN)
    w2t, b2 = linear(k2, HIDDEN, HIDDEN)
    w3t, b3 = linear(k3, HIDDEN, num_actions)
    return (w1t, b1, w2t, b2, w3t, b3)


def dqn_reference(x, params):
    """Pure f32 reference matching the PyTorch module semantics."""
    w1t, b1, w2t, b2, w3t, b3 = params
    h1 = jnp.maximum(x @ w1t + b1, 0.0)
    h2 = jnp.maximum(h1 @ w2t + b2, 0.0)
    return h2 @ w3t + b3


if __name__ == "__main__":
    key = jax.random.PRNGKey(0)
    k_x, k_x2, k_p = jax.random.split(key, 3)

    num_actions = 2
    params = init_params(k_p, num_actions)
    packed = pack_params(params)

    # bf16 weights/activations into the MXU -> small rounding vs the f32 reference.
    TOL = dict(atol=3e-2, rtol=3e-2)

    # Small inference-style batch (single grid step).
    B = 8
    x = jax.random.normal(k_x, (B, IN_FEATURES), jnp.float32)
    out = jax.block_until_ready(dqn_forward(x, packed))
    ref = dqn_reference(x, params)
    assert out.shape == (B, num_actions)
    assert jnp.allclose(out, ref, **TOL), "mismatch vs reference (B=8)"

    # Replay-style batch: exercises multi-tile grid (>=2 steps) + batch padding
    # + the narrow (num_actions-wide) output store.
    B2 = 300
    x2 = jax.random.normal(k_x2, (B2, IN_FEATURES), jnp.float32)
    out2 = jax.block_until_ready(dqn_forward(x2, packed))            # default block_b
    out2b = jax.block_until_ready(dqn_forward(x2, packed, block_b=128))  # 3-step grid
    ref2 = dqn_reference(x2, params)
    assert out2.shape == (B2, num_actions)
    assert jnp.allclose(out2, ref2, **TOL), "mismatch vs reference (B=300, default tile)"
    assert jnp.allclose(out2b, ref2, **TOL), "mismatch vs reference (B=300, tile=128)"

    print("KERNEL_OK")
</pallas_src>

<mosaic_0001>
module attributes {stable_mosaic.version = 11 : i64} {
  func.func @dqn_kernel(%arg0: i32, %arg1: memref<8x4xf32, #tpu.memory_space<vmem>>, %arg2: memref<8x128xf32, #tpu.memory_space<vmem>>, %arg3: memref<128x128xbf16, #tpu.memory_space<vmem>>, %arg4: memref<128x128xbf16, #tpu.memory_space<vmem>>, %arg5: memref<8x2xf32, #tpu.memory_space<vmem>>) attributes {dimension_semantics = [#tpu.dimension_semantics<parallel>], iteration_bounds = array<i64: 1>, scalar_prefetch = 0 : i64, scratch_operands = 0 : i64, tpu.core_type = #tpu.core_type<tc>, window_params = [{transform_indices = @transform_0, window_bounds = array<i64: 8, 4>}, {pipeline_mode = #tpu.pipeline_mode<synchronous>, transform_indices = @transform_1, window_bounds = array<i64: 8, 128>}, {pipeline_mode = #tpu.pipeline_mode<synchronous>, transform_indices = @transform_2, window_bounds = array<i64: 128, 128>}, {pipeline_mode = #tpu.pipeline_mode<synchronous>, transform_indices = @transform_3, window_bounds = array<i64: 128, 128>}, {transform_indices = @transform_4, window_bounds = array<i64: 8, 2>}]} {
    %c0 = arith.constant 0 : index
    %c0_0 = arith.constant 0 : index
    %0 = vector.load %arg2[%c0, %c0_0] : memref<8x128xf32, #tpu.memory_space<vmem>>, vector<8x128xf32>
    %1 = vector.extract_strided_slice %0 {offsets = [0, 0], sizes = [4, 128], strides = [1, 1]} : vector<8x128xf32> to vector<4x128xf32>
    %2 = vector.extract_strided_slice %0 {offsets = [4, 0], sizes = [1, 128], strides = [1, 1]} : vector<8x128xf32> to vector<1x128xf32>
    %3 = vector.extract_strided_slice %0 {offsets = [5, 0], sizes = [1, 128], strides = [1, 1]} : vector<8x128xf32> to vector<1x128xf32>
    %4 = vector.extract_strided_slice %0 {offsets = [6, 0], sizes = [1, 2], strides = [1, 1]} : vector<8x128xf32> to vector<1x2xf32>
    %c0_1 = arith.constant 0 : index
    %c0_2 = arith.constant 0 : index
    %5 = vector.load %arg1[%c0_1, %c0_2] : memref<8x4xf32, #tpu.memory_space<vmem>>, vector<8x4xf32>
    %6 = vector.extract_strided_slice %5 {offsets = [0, 0], sizes = [8, 1], strides = [1, 1]} : vector<8x4xf32> to vector<8x1xf32>
    %7 = vector.extract_strided_slice %1 {offsets = [0, 0], sizes = [1, 128], strides = [1, 1]} : vector<4x128xf32> to vector<1x128xf32>
    %8 = vector.broadcast %6 : vector<8x1xf32> to vector<8x128xf32>
    %9 = vector.broadcast %7 : vector<1x128xf32> to vector<8x128xf32>
    %10 = arith.mulf %8, %9 : vector<8x128xf32>
    %11 = vector.broadcast %2 : vector<1x128xf32> to vector<8x128xf32>
    %12 = arith.addf %10, %11 : vector<8x128xf32>
    %13 = vector.extract_strided_slice %5 {offsets = [0, 1], sizes = [8, 1], strides = [1, 1]} : vector<8x4xf32> to vector<8x1xf32>
    %14 = vector.extract_strided_slice %1 {offsets = [1, 0], sizes = [1, 128], strides = [1, 1]} : vector<4x128xf32> to vector<1x128xf32>
    %15 = vector.broadcast %13 : vector<8x1xf32> to vector<8x128xf32>
    %16 = vector.broadcast %14 : vector<1x128xf32> to vector<8x128xf32>
    %17 = arith.mulf %15, %16 : vector<8x128xf32>
    %18 = arith.addf %12, %17 : vector<8x128xf32>
    %19 = vector.extract_strided_slice %5 {offsets = [0, 2], sizes = [8, 1], strides = [1, 1]} : vector<8x4xf32> to vector<8x1xf32>
    %20 = vector.extract_strided_slice %1 {offsets = [2, 0], sizes = [1, 128], strides = [1, 1]} : vector<4x128xf32> to vector<1x128xf32>
    %21 = vector.broadcast %19 : vector<8x1xf32> to vector<8x128xf32>
    %22 = vector.broadcast %20 : vector<1x128xf32> to vector<8x128xf32>
    %23 = arith.mulf %21, %22 : vector<8x128xf32>
    %24 = arith.addf %18, %23 : vector<8x128xf32>
    %25 = vector.extract_strided_slice %5 {offsets = [0, 3], sizes = [8, 1], strides = [1, 1]} : vector<8x4xf32> to vector<8x1xf32>
    %26 = vector.extract_strided_slice %1 {offsets = [3, 0], sizes = [1, 128], strides = [1, 1]} : vector<4x128xf32> to vector<1x128xf32>
    %27 = vector.broadcast %25 : vector<8x1xf32> to vector<8x128xf32>
    %28 = vector.broadcast %26 : vector<1x128xf32> to vector<8x128xf32>
    %29 = arith.mulf %27, %28 : vector<8x128xf32>
    %30 = arith.addf %24, %29 : vector<8x128xf32>
    %cst = arith.constant 0.000000e+00 : f32
    %31 = vector.broadcast %cst : f32 to vector<8x128xf32>
    %32 = arith.maximumf %30, %31 : vector<8x128xf32>
    %33 = arith.truncf %32 : vector<8x128xf32> to vector<8x128xbf16>
    %c0_3 = arith.constant 0 : index
    %c0_4 = arith.constant 0 : index
    %34 = vector.load %arg3[%c0_3, %c0_4] : memref<128x128xbf16, #tpu.memory_space<vmem>>, vector<128x128xbf16>
    %cst_5 = arith.constant dense<0.000000e+00> : vector<8x128xf32>
    %35 = tpu.matmul %33, %34, %cst_5 {dimension_numbers = #tpu.dot_dimension_numbers<[1], [0], [0], [1], [0, 0, 1, 1], [], []>} : vector<8x128xbf16>, vector<128x128xbf16>, vector<8x128xf32> -> vector<8x128xf32>
    %36 = vector.broadcast %3 : vector<1x128xf32> to vector<8x128xf32>
    %37 = arith.addf %35, %36 : vector<8x128xf32>
    %cst_6 = arith.constant 0.000000e+00 : f32
    %38 = vector.broadcast %cst_6 : f32 to vector<8x128xf32>
    %39 = arith.maximumf %37, %38 : vector<8x128xf32>
    %40 = arith.truncf %39 : vector<8x128xf32> to vector<8x128xbf16>
    %c0_7 = arith.constant 0 : index
    %c0_8 = arith.constant 0 : index
    %41 = vector.load %arg4[%c0_7, %c0_8] : memref<128x128xbf16, #tpu.memory_space<vmem>>, vector<128x128xbf16>
    %cst_9 = arith.constant dense<0.000000e+00> : vector<8x128xf32>
    %42 = tpu.matmul %40, %41, %cst_9 {dimension_numbers = #tpu.dot_dimension_numbers<[1], [0], [0], [1], [0, 0, 1, 1], [], []>} : vector<8x128xbf16>, vector<128x128xbf16>, vector<8x128xf32> -> vector<8x128xf32>
    %43 = vector.extract_strided_slice %42 {offsets = [0, 0], sizes = [8, 2], strides = [1, 1]} : vector<8x128xf32> to vector<8x2xf32>
    %44 = vector.broadcast %4 : vector<1x2xf32> to vector<8x2xf32>
    %45 = arith.addf %43, %44 : vector<8x2xf32>
    %c0_10 = arith.constant 0 : index
    %c0_11 = arith.constant 0 : index
    %46 = vector.load %arg5[%c0_10, %c0_11] : memref<8x2xf32, #tpu.memory_space<vmem>>, vector<8x2xf32>
    tpu.vector_store %arg5[%c0_10, %c0_11], %45 {strides = array<i32>} : memref<8x2xf32, #tpu.memory_space<vmem>>, vector<8x2xf32>,
    return
  }
  func.func @transform_0(%arg0: i32) -> (i32, i32) {
    %c0_i32 = arith.constant 0 : i32
    %c0_i32_0 = arith.constant 0 : i32
    return %arg0, %c0_i32 : i32, i32
  }
  func.func @transform_1(%arg0: i32) -> (i32, i32) {
    %c0_i32 = arith.constant 0 : i32
    %c0_i32_0 = arith.constant 0 : i32
    %c0_i32_1 = arith.constant 0 : i32
    return %c0_i32, %c0_i32_0 : i32, i32
  }
  func.func @transform_2(%arg0: i32) -> (i32, i32) {
    %c0_i32 = arith.constant 0 : i32
    %c0_i32_0 = arith.constant 0 : i32
    %c0_i32_1 = arith.constant 0 : i32
    return %c0_i32, %c0_i32_0 : i32, i32
  }
  func.func @transform_3(%arg0: i32) -> (i32, i32) {
    %c0_i32 = arith.constant 0 : i32
    %c0_i32_0 = arith.constant 0 : i32
    %c0_i32_1 = arith.constant 0 : i32
    return %c0_i32, %c0_i32_0 : i32, i32
  }
  func.func @transform_4(%arg0: i32) -> (i32, i32) {
    %c0_i32 = arith.constant 0 : i32
    %c0_i32_0 = arith.constant 0 : i32
    return %arg0, %c0_i32 : i32, i32
  }
}

</mosaic_0001>

<llo_original>
// kernel: tpu_custom_call.1
$region0: #{tpu_custom_call.1}
  #allocation0 [shape = 'u32[]', space=smem, size = 0x4, offset = 0x4, fixed_abs, tag = 'smem constant byte address 0x4 - core index']
  #allocation1 [shape = 'u32[144,128]{1,0:T(1,128)}', space=vmem, size = 0x12000, scoped, tag = 'internal scratch']
  %s0 = inlined_call_operand.vmem [shape: f32[8,4], index: 0, kind: input, shape index: {}]
  %s1 = inlined_call_operand.vmem [shape: f32[8,128], index: 1, kind: input, shape index: {}]
  %s2 = inlined_call_operand.hbm [shape: bf16[128,128], index: 2, kind: input, shape index: {}]
  %s3 = inlined_call_operand.hbm [shape: bf16[128,128], index: 3, kind: input, shape index: {}]
  %s4 = inlined_call_operand.vmem [shape: f32[8,2], index: 4, kind: output, shape index: {}]
  %s5 = sld [smem:[#allocation0]]
  $region34: #{tpu_custom_call.1} parent=0
    _
  %s7 = ssub.s32 1, %s5
  %s8 = scalar_select 0, %s7, %s5
  $region1: #{tpu_custom_call.1} parent=0
    #allocation2 [shape = 'u8[32768]{0}', space=vmem, size = 0x8000, scoped, tag = 'input window, operand 2, single buffered']
    #allocation3 [shape = 's32[1]{0}', space=sflag, size = 0x4, scoped, tag = 'scoped memory for tpu_custom_call.1']
    #allocation4 [shape = 'u8[32768]{0}', space=vmem, size = 0x8000, scoped, tag = 'input window, operand 3, single buffered']
    #allocation5 [shape = 's32[1]{0}', space=sflag, size = 0x4, scoped, tag = 'scoped memory for tpu_custom_call.1']
    %9 = vsyncpa [#allocation3], 0
    %10 = vsyncpa [#allocation5], 0
    // Predicated region
    $region2: #{tpu_custom_call.1} parent=1 // pred_check
      _
    $region3: #{tpu_custom_call.1} parent=1 // pred_check_branch
      %12 = sbr.rel (0) target = $region5
    $region4: #{tpu_custom_call.1} parent=1 // pred_region
      _
    $region5: #{tpu_custom_call.1} parent=1 // pred_fallthru
      _
    // Predicated region
    $region6: #{tpu_custom_call.1} parent=1 // pred_check
      _
    $region7: #{tpu_custom_call.1} parent=1 // pred_check_branch
      %14 = sbr.rel (0) target = $region9
    $region8: #{tpu_custom_call.1} parent=1 // pred_region
      _
    $region9: #{tpu_custom_call.1} parent=1 // pred_fallthru
      _
    // Predicated region
    $region10: #{tpu_custom_call.1} parent=1 // pred_check
      _
    $region11: #{tpu_custom_call.1} parent=1 // pred_check_branch
      %16 = sbr.rel (0) target = $region13
    $region12: #{tpu_custom_call.1} parent=1 // pred_region
      %s18 = ssub.s32 1024, 1024
      %19 = vsyncadd [#allocation3], %s18
      %s20 = sshll.u32 [#allocation2], 4
      %s21 = int_to_ptr.vmem [resolvable:$true] %s20
      %26 = dma.hbm_to_vmem [thread:$0]  %s2, 1024, %s21, [#allocation3], 64, 64, 4
    $region13: #{tpu_custom_call.1} parent=1 // pred_fallthru
      _
    // Predicated region
    $region14: #{tpu_custom_call.1} parent=1 // pred_check
      _
    $region15: #{tpu_custom_call.1} parent=1 // pred_check_branch
      %28 = sbr.rel (0) target = $region17
    $region16: #{tpu_custom_call.1} parent=1 // pred_region
      %s30 = ssub.s32 1024, 1024
      %31 = vsyncadd [#allocation5], %s30
      %s32 = sshll.u32 [#allocation4], 4
      %s33 = int_to_ptr.vmem [resolvable:$true] %s32
      %38 = dma.hbm_to_vmem [thread:$0]  %s3, 1024, %s33, [#allocation5], 64, 64, 4
    $region17: #{tpu_custom_call.1} parent=1 // pred_fallthru
      _
    // Predicated region
    $region18: #{tpu_custom_call.1} parent=1 // pred_check
      _
    $region19: #{tpu_custom_call.1} parent=1 // pred_check_branch
      %40 = sbr.rel (0) target = $region21
    $region20: #{tpu_custom_call.1} parent=1 // pred_region
      %41 = dma.done [#allocation3], 1024
    $region21: #{tpu_custom_call.1} parent=1 // pred_fallthru
      _
    // Predicated region
    $region22: #{tpu_custom_call.1} parent=1 // pred_check
      _
    $region23: #{tpu_custom_call.1} parent=1 // pred_check_branch
      %43 = sbr.rel (0) target = $region25
    $region24: #{tpu_custom_call.1} parent=1 // pred_region
      %44 = dma.done [#allocation5], 1024
    $region25: #{tpu_custom_call.1} parent=1 // pred_fallthru
      _
    %v46 = vld [vmem:[%s1] sm:$0xff]
    %v47 = vld [vmem:[%s0] sm:$0xff]
    %49 = vset.pattern.permute.xlu0 0
    %50 = vperm.xlu0 %49, %v47
    %v51 = vpop.permute.xlu0 %50
    %v53 = vlaneseq
    %v54 = vshrl.u32 %v53, 7
    %v55 = vsub.s32 0, %v54
    %v56 = vrot.slane %v46, %v55
    %v57 = vmul.f32 %v51, %v56
    %v58 = vlaneseq
    %v59 = vshrl.u32 %v58, 7
    %v60 = vsub.s32 4, %v59
    %v61 = vrot.slane %v46, %v60
    %v62 = vadd.f32 %v57, %v61
    %63 = vset.pattern.permute.xlu0 1
    %64 = vperm.xlu0 %63, %v47
    %v65 = vpop.permute.xlu0 %64
    %v67 = vlaneseq
    %v68 = vshrl.u32 %v67, 7
    %v69 = vsub.s32 1, %v68
    %v70 = vrot.slane %v46, %v69
    %v71 = vmul.f32 %v65, %v70
    %v72 = vadd.f32 %v62, %v71
    %73 = vset.pattern.permute.xlu0 2
    %74 = vperm.xlu0 %73, %v47
    %v75 = vpop.permute.xlu0 %74
    %v77 = vlaneseq
    %v78 = vshrl.u32 %v77, 7
    %v79 = vsub.s32 2, %v78
    %v80 = vrot.slane %v46, %v79
    %v81 = vmul.f32 %v75, %v80
    %v82 = vadd.f32 %v72, %v81
    %83 = vset.pattern.permute.xlu0 3
    %84 = vperm.xlu0 %83, %v47
    %v85 = vpop.permute.xlu0 %84
    %v87 = vlaneseq
    %v88 = vshrl.u32 %v87, 7
    %v89 = vsub.s32 3, %v88
    %v90 = vrot.slane %v46, %v89
    %v91 = vmul.f32 %v85, %v90
    %v92 = vadd.f32 %v82, %v91
    %v93 = vmax.f32 %v92, 0.0
    %v94 = vpack.c.bf16 %v93, %v93
    %v95 = vld [vmem:[#allocation2] sm:$0xf]
    %v96 = vld [vmem:[#allocation2 + $0x4] sm:$0xf]
    %v97 = vld [vmem:[#allocation2 + $0x8] sm:$0xf]
    %v98 = vld [vmem:[#allocation2 + $0xc] sm:$0xf]
    %v99 = vld [vmem:[#allocation2 + $0x10] sm:$0xf]
    %v100 = vld [vmem:[#allocation2 + $0x14] sm:$0xf]
    %v101 = vld [vmem:[#allocation2 + $0x18] sm:$0xf]
    %v102 = vld [vmem:[#allocation2 + $0x1c] sm:$0xf]
    %v103 = vld [vmem:[#allocation2 + $0x20] sm:$0xf]
    %v104 = vld [vmem:[#allocation2 + $0x24] sm:$0xf]
    %v105 = vld [vmem:[#allocation2 + $0x28] sm:$0xf]
    %v106 = vld [vmem:[#allocation2 + $0x2c] sm:$0xf]
    %v107 = vld [vmem:[#allocation2 + $0x30] sm:$0xf]
    %v108 = vld [vmem:[#allocation2 + $0x34] sm:$0xf]
    %v109 = vld [vmem:[#allocation2 + $0x38] sm:$0xf]
    %v110 = vld [vmem:[#allocation2 + $0x3c] sm:$0xf]
    %v111 = vlaneseq
    %v112 = vshrl.u32 %v111, 7
    %v113 = vsub.s32 5, %v112
    %v114 = vrot.slane %v46, %v113
    %v131 = vunpack.c.l.b16 %v95
    %v132 = vunpack.c.l.b16 %v96
    %v133 = vunpack.c.l.b16 %v97
    %v134 = vunpack.c.l.b16 %v98
    %v135 = vunpack.c.l.b16 %v99
    %v136 = vunpack.c.l.b16 %v100
    %v137 = vunpack.c.l.b16 %v101
    %v138 = vunpack.c.l.b16 %v102
    %v139 = vunpack.c.l.b16 %v103
    %v140 = vunpack.c.l.b16 %v104
    %v141 = vunpack.c.l.b16 %v105
    %v142 = vunpack.c.l.b16 %v106
    %v143 = vunpack.c.l.b16 %v107
    %v144 = vunpack.c.l.b16 %v108
    %v145 = vunpack.c.l.b16 %v109
    %v146 = vunpack.c.l.b16 %v110
    %v147 = vpack.c.b16 %v132, %v131
    %v148 = vpack.c.b16 %v134, %v133
    %v149 = vpack.c.b16 %v136, %v135
    %v150 = vpack.c.b16 %v138, %v137
    %v151 = vpack.c.b16 %v140, %v139
    %v152 = vpack.c.b16 %v142, %v141
    %v153 = vpack.c.b16 %v144, %v143
    %v154 = vpack.c.b16 %v146, %v145
    %163 = vmatprep.subr.bf16.mxu0 0
    %164 = vmatpush1.bf16.msra.mxu0 %v147
    %165 = vmatprep.subr.bf16.mxu0 0
    %166 = vmatpush1.bf16.msra.mxu0 %v148
    %167 = vmatprep.subr.bf16.mxu0 0
    %168 = vmatpush1.bf16.msra.mxu0 %v149
    %169 = vmatprep.subr.bf16.mxu0 0
    %170 = vmatpush1.bf16.msra.mxu0 %v150
    %171 = vmatprep.subr.bf16.mxu0 0
    %172 = vmatpush1.bf16.msra.mxu0 %v151
    %173 = vmatprep.subr.bf16.mxu0 0
    %174 = vmatpush1.bf16.msra.mxu0 %v152
    %175 = vmatprep.subr.bf16.mxu0 0
    %176 = vmatpush1.bf16.msra.mxu0 %v153
    %177 = vmatprep.subr.bf16.mxu0 0
    %178 = vmatpush1.bf16.msra.mxu0 %v154
    %179 = vmatprep.subr.bf16.mxu0 0
    %180 = vmatpush1.bf16.msra.mxu0 0
    %181 = vmatprep.subr.bf16.mxu0 0
    %182 = vmatpush1.bf16.msra.mxu0 0
    %183 = vmatprep.subr.bf16.mxu0 0
    %184 = vmatpush1.bf16.msra.mxu0 0
    %185 = vmatprep.subr.bf16.mxu0 0
    %186 = vmatpush1.bf16.msra.mxu0 0
    %187 = vmatprep.subr.bf16.mxu0 0
    %188 = vmatpush1.bf16.msra.mxu0 0
    %189 = vmatprep.subr.bf16.mxu0 0
    %190 = vmatpush1.bf16.msra.mxu0 0
    %191 = vmatprep.subr.bf16.mxu0 0
    %192 = vmatpush1.bf16.msra.mxu0 0
    %193 = vmatprep.subr.bf16.mxu0 0
    %194 = vmatpush1.bf16.msra.mxu0 0
    %195 = vmatprep.mubr.bf16.mxu0 0
    %196 = vmatmul.mubr.bf16.gmra.mrb[0].mxu0 %v94
    %v197 = vpop.f32.mrb[0].mxu0
    %v198 = vadd.f32 %v114, %v197
    %v199 = vpop.f32.mrb[0].mxu0
    %v200 = vpop.f32.mrb[0].mxu0
    %v201 = vpop.f32.mrb[0].mxu0
    %202 = vdwg.mxu0
    %v203 = vmax.f32 %v198, 0.0
    %v204 = vpack.c.bf16 %v203, %v203
    %v205 = vld [vmem:[#allocation4] sm:$0xf]
    %v206 = vld [vmem:[#allocation4 + $0x4] sm:$0xf]
    %v207 = vld [vmem:[#allocation4 + $0x8] sm:$0xf]
    %v208 = vld [vmem:[#allocation4 + $0xc] sm:$0xf]
    %v209 = vld [vmem:[#allocation4 + $0x10] sm:$0xf]
    %v210 = vld [vmem:[#allocation4 + $0x14] sm:$0xf]
    %v211 = vld [vmem:[#allocation4 + $0x18] sm:$0xf]
    %v212 = vld [vmem:[#allocation4 + $0x1c] sm:$0xf]
    %v213 = vld [vmem:[#allocation4 + $0x20] sm:$0xf]
    %v214 = vld [vmem:[#allocation4 + $0x24] sm:$0xf]
    %v215 = vld [vmem:[#allocation4 + $0x28] sm:$0xf]
    %v216 = vld [vmem:[#allocation4 + $0x2c] sm:$0xf]
    %v217 = vld [vmem:[#allocation4 + $0x30] sm:$0xf]
    %v218 = vld [vmem:[#allocation4 + $0x34] sm:$0xf]
    %v219 = vld [vmem:[#allocation4 + $0x38] sm:$0xf]
    %v220 = vld [vmem:[#allocation4 + $0x3c] sm:$0xf]
    %v237 = vunpack.c.l.b16 %v205
    %v238 = vunpack.c.l.b16 %v206
    %v239 = vunpack.c.l.b16 %v207
    %v240 = vunpack.c.l.b16 %v208
    %v241 = vunpack.c.l.b16 %v209
    %v242 = vunpack.c.l.b16 %v210
    %v243 = vunpack.c.l.b16 %v211
    %v244 = vunpack.c.l.b16 %v212
    %v245 = vunpack.c.l.b16 %v213
    %v246 = vunpack.c.l.b16 %v214
    %v247 = vunpack.c.l.b16 %v215
    %v248 = vunpack.c.l.b16 %v216
    %v249 = vunpack.c.l.b16 %v217
    %v250 = vunpack.c.l.b16 %v218
    %v251 = vunpack.c.l.b16 %v219
    %v252 = vunpack.c.l.b16 %v220
    %v253 = vpack.c.b16 %v238, %v237
    %v254 = vpack.c.b16 %v240, %v239
    %v255 = vpack.c.b16 %v242, %v241
    %v256 = vpack.c.b16 %v244, %v243
    %v257 = vpack.c.b16 %v246, %v245
    %v258 = vpack.c.b16 %v248, %v247
    %v259 = vpack.c.b16 %v250, %v249
    %v260 = vpack.c.b16 %v252, %v251
    %269 = vmatprep.subr.bf16.mxu0 0
    %270 = vmatpush1.bf16.msra.mxu0 %v253
    %271 = vmatprep.subr.bf16.mxu0 0
    %272 = vmatpush1.bf16.msra.mxu0 %v254
    %273 = vmatprep.subr.bf16.mxu0 0
    %274 = vmatpush1.bf16.msra.mxu0 %v255
    %275 = vmatprep.subr.bf16.mxu0 0
    %276 = vmatpush1.bf16.msra.mxu0 %v256
    %277 = vmatprep.subr.bf16.mxu0 0
    %278 = vmatpush1.bf16.msra.mxu0 %v257
    %279 = vmatprep.subr.bf16.mxu0 0
    %280 = vmatpush1.bf16.msra.mxu0 %v258
    %281 = vmatprep.subr.bf16.mxu0 0
    %282 = vmatpush1.bf16.msra.mxu0 %v259
    %283 = vmatprep.subr.bf16.mxu0 0
    %284 = vmatpush1.bf16.msra.mxu0 %v260
    %285 = vmatprep.subr.bf16.mxu0 0
    %286 = vmatpush1.bf16.msra.mxu0 0
    %287 = vmatprep.subr.bf16.mxu0 0
    %288 = vmatpush1.bf16.msra.mxu0 0
    %289 = vmatprep.subr.bf16.mxu0 0
    %290 = vmatpush1.bf16.msra.mxu0 0
    %291 = vmatprep.subr.bf16.mxu0 0
    %292 = vmatpush1.bf16.msra.mxu0 0
    %293 = vmatprep.subr.bf16.mxu0 0
    %294 = vmatpush1.bf16.msra.mxu0 0
    %295 = vmatprep.subr.bf16.mxu0 0
    %296 = vmatpush1.bf16.msra.mxu0 0
    %297 = vmatprep.subr.bf16.mxu0 0
    %298 = vmatpush1.bf16.msra.mxu0 0
    %299 = vmatprep.subr.bf16.mxu0 0
    %300 = vmatpush1.bf16.msra.mxu0 0
    %301 = vmatprep.mubr.bf16.mxu0 0
    %302 = vmatmul.mubr.bf16.gmra.mrb[0].mxu0 %v204
    %v303 = vpop.f32.mrb[0].mxu0
    %v304 = vadd.f32 0.0, %v303
    %v305 = vpop.f32.mrb[0].mxu0
    %v306 = vpop.f32.mrb[0].mxu0
    %v307 = vpop.f32.mrb[0].mxu0
    %308 = vdwg.mxu0
    %v309 = vlaneseq
    %v310 = vshrl.u32 %v309, 7
    %v311 = vsub.s32 6, %v310
    %v312 = vrot.slane %v46, %v311
    %v313 = vadd.f32 %v304, %v312
    %vm314 = vcmask 15360
    %315 = vst.msk [vmem:[%s4] sm:$0xff] %vm314, %v313
    // Predicated region
    $region26: #{tpu_custom_call.1} parent=1 // pred_check
      _
    $region27: #{tpu_custom_call.1} parent=1 // pred_check_branch
      %317 = sbr.rel (0) target = $region29
    $region28: #{tpu_custom_call.1} parent=1 // pred_region
      _
    $region29: #{tpu_custom_call.1} parent=1 // pred_fallthru
      _
    // Predicated region
    $region30: #{tpu_custom_call.1} parent=1 // pred_check
      _
    $region31: #{tpu_custom_call.1} parent=1 // pred_check_branch
      %319 = sbr.rel (0) target = $region33
    $region32: #{tpu_custom_call.1} parent=1 // pred_region
      _
    $region33: #{tpu_custom_call.1} parent=1 // pred_fallthru
      _
    %320 = vsyncpa [#allocation3], 1
    %321 = vsyncpa [#allocation5], 1

</llo_original>
